<compile_context>
chip_gen: v7x
topology: tpu7x:2x2x1
jax: 0.10.0
libtpu: 0.0.40
codegen_flags: <defaults>
</compile_context>

<pallas_src>
import functools

import jax
import jax.numpy as jnp
import numpy as np
from jax import lax
from jax.experimental import pallas as pl
from jax.experimental.pallas import tpu as pltpu

_VMEM_LIMIT = 32 * 1024 * 1024


# ---------------------------------------------------------------------------
# small helpers
# ---------------------------------------------------------------------------
def _spatial_tile(hw, target):
    """Largest multiple of 128 dividing hw and <= target, else hw (full extent).

    Full-extent fallback satisfies the "block equals full dim" rule when hw has
    no 128-multiple divisor (fine for the demo; very large non-128-multiple
    H*W with huge C would need a padded-lane layout — TODO(synk)).
    """
    best = None
    t = 128
    limit = min(hw, max(int(target), 0))
    while t <= limit:
        if hw % t == 0:
            best = t
        t += 128
    return best if best is not None else hw


def _lane_chunk(hw, hd):
    """In-kernel lane-chunk length for the attention kernel (vreg-resident)."""
    cap = (16384 // max(hd, 1)) // 128 * 128      # hd * TL * 4B <= 64 KiB per tile
    cap = max(128, min(cap, 2048))
    if hw <= cap:
        return hw
    return cap


# ---------------------------------------------------------------------------
# Pallas kernel 1: qkv 1x1 conv as a tiled matmul, channel-major output.
#   x_flat: [B*HW, C]   w_qkv: [3C, C] (bf16)   ->   qkv_t: [B, 3C, HW]
#   q rows (first C output rows) are pre-scaled by head_dim**-0.5 in the epilogue.
# ---------------------------------------------------------------------------
def _qkv_kernel(x_ref, w_ref, o_ref, *, C, scale):
    x = x_ref[...].astype(jnp.bfloat16)                       # [ts, C]
    w = w_ref[...]                                            # [3C, C] bf16
    # out[oc, s] = sum_c w[oc, c] * x[s, c]   (lane-dense [3C, ts] store)
    acc = lax.dot_general(w, x, (((1,), (1,)), ((), ())),
                          preferred_element_type=jnp.float32)
    row = lax.broadcasted_iota(jnp.int32, (acc.shape[0], 1), 0)
    acc = acc * jnp.where(row < C, jnp.float32(scale), jnp.float32(1.0))
    o_ref[0] = acc.astype(o_ref.dtype)


def qkv_matmul_t(x_flat, w_qkv_bf16, *, B, HW, scale, out_dtype):
    M, C = x_flat.shape
    assert M == B * HW
    Cout = w_qkv_bf16.shape[0]
    per_lane = 2 * (C * x_flat.dtype.itemsize + Cout * jnp.dtype(out_dtype).itemsize)
    ts = _spatial_tile(HW, (10 << 20) // per_lane)
    S = HW // ts
    kernel = functools.partial(_qkv_kernel, C=C, scale=scale)
    return pl.pallas_call(
        kernel,
        out_shape=jax.ShapeDtypeStruct((B, Cout, HW), out_dtype),
        grid_spec=pltpu.PrefetchScalarGridSpec(
            num_scalar_prefetch=0,
            grid=(B, S),
            in_specs=[
                pl.BlockSpec((ts, C), lambda b, s: (b * S + s, 0)),
                pl.BlockSpec((Cout, C), lambda b, s: (0, 0)),
            ],
            out_specs=pl.BlockSpec((1, Cout, ts), lambda b, s: (b, 0, s)),
        ),
        compiler_params=pltpu.CompilerParams(
            dimension_semantics=("parallel", "parallel"),
            vmem_limit_bytes=_VMEM_LIMIT,
        ),
    )(x_flat, w_qkv_bf16)


# ---------------------------------------------------------------------------
# Pallas kernel 2: fused multi-dilation local attention (all heads, one call)
#   grid (B, num_heads); q/k/v blocks [1, hd, HW] sliced straight out of qkv_t.
#   Spatial axis is processed in lane chunks; neighbors come from a zero-padded
#   VMEM copy of k/v via pl.ds reads; masked two-pass softmax per chunk.
# ---------------------------------------------------------------------------
def _dilate_attn_kernel(q_ref, k_ref, v_ref, o_ref, kpad_ref, vpad_ref, *,
                        dilation, ks, H, W, nh, PAD, TL, n_chunks):
    HW = H * W
    hd = q_ref.shape[1]

    # Zero halos + copy this head's k/v into the padded neighbor buffers.  The
    # halo zeros reproduce nn.Unfold's zero padding for vertical out-of-bounds
    # taps; horizontal wrap-around taps are killed by the `valid` mask below.
    zpad = jnp.zeros((hd, PAD), kpad_ref.dtype)
    kpad_ref[:, :PAD] = zpad
    kpad_ref[:, PAD + HW:] = zpad
    vpad_ref[:, :PAD] = zpad
    vpad_ref[:, PAD + HW:] = zpad
    kpad_ref[:, PAD:PAD + HW] = k_ref[0]
    vpad_ref[:, PAD:PAD + HW] = v_ref[0]

    dil_idx = pl.program_id(1) // nh

    def chunk(start, dil):
        pad_sp = dil * (ks - 1) // 2
        q = q_ref[0, :, pl.ds(start, TL)].astype(jnp.float32)       # [hd, TL]
        pos = start + lax.broadcasted_iota(jnp.int32, (1, TL), 1)
        ys = pos // W
        xs = pos - ys * W

        # pass 1: masked logits for the ks*ks taps (q already scaled in qkv).
        taps = []
        for ky in range(ks):
            dy = ky * dil - pad_sp
            for kx in range(ks):
                dx = kx * dil - pad_sp
                s = dy * W + dx
                kk = kpad_ref[:, pl.ds(PAD + start + s, TL)].astype(jnp.float32)
                valid = ((ys + dy >= 0) & (ys + dy < H) &
                         (xs + dx >= 0) & (xs + dx < W))
                # Unfold zero-padding semantics: OOB neighbor => k == 0 => logit 0
                # (still contributes exp(0 - m) to the denominator).
                logit = jnp.where(valid,
                                  jnp.sum(q * kk, axis=0, keepdims=True),
                                  jnp.float32(0.0))
                taps.append((s, valid, logit))

        m = taps[0][2]
        for _, _, lg in taps[1:]:
            m = jnp.maximum(m, lg)

        # pass 2: exp / denominator / weighted-value accumulation.
        den = jnp.zeros((1, TL), jnp.float32)
        acc = jnp.zeros((hd, TL), jnp.float32)
        for s, valid, lg in taps:
            p = jnp.exp(lg - m)
            den = den + p
            vv = vpad_ref[:, pl.ds(PAD + start + s, TL)].astype(jnp.float32)
            acc = acc + jnp.where(valid, p, jnp.float32(0.0)) * vv

        out = acc * pl.reciprocal(den, approx=True)
        o_ref[0, :, pl.ds(start, TL)] = out.astype(o_ref.dtype)

    # Static branch per dilation rate (head h belongs to group h // nh).
    for i, dil in enumerate(dilation):
        @pl.when(dil_idx == i)
        def _(dil=dil):
            if n_chunks == 1:
                chunk(0, dil)
            else:
                @pl.loop(0, n_chunks)
                def _(c):
                    # Last chunk is clamped (recomputes a small overlap) so every
                    # read / write stays in bounds without ragged-tail logic.
                    chunk(jnp.minimum(c * TL, HW - TL), dil)


def dilate_attention_fused(qkv_t, *, dilation, kernel_size, H, W, num_heads, nh, hd):
    B, _, HW = qkv_t.shape
    C = num_heads * hd
    max_shift = max(d * (kernel_size - 1) // 2 for d in dilation) * (W + 1)
    PAD = max(128, -(-max_shift // 128) * 128)
    TL = _lane_chunk(HW, hd)
    n_chunks = -(-HW // TL)
    kernel = functools.partial(
        _dilate_attn_kernel, dilation=tuple(dilation), ks=kernel_size,
        H=H, W=W, nh=nh, PAD=PAD, TL=TL, n_chunks=n_chunks)
    dt_bytes = qkv_t.dtype.itemsize
    cost = pl.CostEstimate(
        flops=B * num_heads * HW * kernel_size ** 2 * (4 * hd + 6),
        transcendentals=B * num_heads * HW * kernel_size ** 2,
        bytes_accessed=4 * B * C * HW * dt_bytes)
    return pl.pallas_call(
        kernel,
        out_shape=jax.ShapeDtypeStruct((B, C, HW), qkv_t.dtype),
        grid_spec=pltpu.PrefetchScalarGridSpec(
            num_scalar_prefetch=0,
            grid=(B, num_heads),
            in_specs=[
                pl.BlockSpec((1, hd, HW), lambda b, h: (b, h, 0)),
                pl.BlockSpec((1, hd, HW), lambda b, h: (b, num_heads + h, 0)),
                pl.BlockSpec((1, hd, HW), lambda b, h: (b, 2 * num_heads + h, 0)),
            ],
            out_specs=pl.BlockSpec((1, hd, HW), lambda b, h: (b, h, 0)),
            scratch_shapes=[
                pltpu.VMEM((hd, HW + 2 * PAD), qkv_t.dtype),
                pltpu.VMEM((hd, HW + 2 * PAD), qkv_t.dtype),
            ],
        ),
        compiler_params=pltpu.CompilerParams(
            dimension_semantics=("parallel", "parallel"),
            vmem_limit_bytes=_VMEM_LIMIT,
        ),
        cost_estimate=cost,
    )(qkv_t, qkv_t, qkv_t)


# ---------------------------------------------------------------------------
# Pallas kernel 3: proj Linear (+bias) off the channel-major attention output.
#   y: [B, C_in, HW],  w_t: [C_in, C_out] (bf16),  bias  ->  [B, HW, C] output.
# ---------------------------------------------------------------------------
def _proj_kernel(y_ref, w_ref, b_ref, o_ref, *, channel_major):
    y = y_ref[0].astype(jnp.bfloat16)                         # [C_in, ts]
    w = w_ref[...]                                            # [C_in, C_out] bf16
    if channel_major:
        acc = lax.dot_general(w, y, (((0,), (0,)), ((), ())),
                              preferred_element_type=jnp.float32)   # [C_out, ts]
    else:
        acc = lax.dot_general(y, w, (((0,), (0,)), ((), ())),
                              preferred_element_type=jnp.float32)   # [ts, C_out]
    o_ref[0] = (acc + b_ref[...].astype(jnp.float32)).astype(o_ref.dtype)


def proj_matmul(y, w_t_bf16, b_proj, *, out_dtype):
    B, C_in, HW = y.shape
    C_out = w_t_bf16.shape[1]
    channel_major = (C_out % 128 != 0)   # keep stores lane-dense for small C
    per_lane = 2 * (C_in * y.dtype.itemsize + C_out * jnp.dtype(out_dtype).itemsize)
    ts = _spatial_tile(HW, (10 << 20) // per_lane)
    S = HW // ts
    kernel = functools.partial(_proj_kernel, channel_major=channel_major)
    if channel_major:
        out_shape = jax.ShapeDtypeStruct((B, C_out, HW), out_dtype)
        out_spec = pl.BlockSpec((1, C_out, ts), lambda b, s: (b, 0, s))
        bias = b_proj.reshape(C_out, 1).astype(jnp.float32)
        b_spec = pl.BlockSpec((C_out, 1), lambda b, s: (0, 0))
    else:
        out_shape = jax.ShapeDtypeStruct((B, HW, C_out), out_dtype)
        out_spec = pl.BlockSpec((1, ts, C_out), lambda b, s: (b, s, 0))
        bias = b_proj.reshape(1, C_out).astype(jnp.float32)
        b_spec = pl.BlockSpec((1, C_out), lambda b, s: (0, 0))
    out = pl.pallas_call(
        kernel,
        out_shape=out_shape,
        grid_spec=pltpu.PrefetchScalarGridSpec(
            num_scalar_prefetch=0,
            grid=(B, S),
            in_specs=[
                pl.BlockSpec((1, C_in, ts), lambda b, s: (b, 0, s)),
                pl.BlockSpec((C_in, C_out), lambda b, s: (0, 0)),
                b_spec,
            ],
            out_specs=out_spec,
        ),
        compiler_params=pltpu.CompilerParams(
            dimension_semantics=("parallel", "parallel"),
            vmem_limit_bytes=_VMEM_LIMIT,
        ),
    )(y, w_t_bf16, bias)
    if channel_major:
        out = jnp.transpose(out, (0, 2, 1))
    return out                                                # [B, HW, C_out]


# ---------------------------------------------------------------------------
# Full forward (matches MultiDilatelocalAttention.forward)
# ---------------------------------------------------------------------------
def multi_dilate_local_attention(x, w_qkv, w_proj, b_proj, *,
                                 num_heads, kernel_size, dilation):
    """x: [B, H, W, C] -> [B, H, W, C]."""
    B, H, W, C = x.shape
    nd = len(dilation)
    assert C % num_heads == 0 and num_heads % nd == 0
    hd = C // num_heads                      # head_dim
    nh = num_heads // nd                     # heads per dilation group
    HW = H * W
    scale = hd ** (-0.5)
    # TODO(synk): pad head_dim / H*W when they are not multiples of 8 (layout req).
    assert hd % 8 == 0 and HW % 8 == 0

    # bf16 intermediates when head_dim is compatible with the (16, 128) bf16
    # tile (head-block channel offsets stay tile-aligned); otherwise keep the
    # input dtype (safe path for the demo's head_dim = 8).
    inter_dtype = jnp.bfloat16 if hd % 16 == 0 else x.dtype

    # Pre-cast weights once (tiny) so kernels never re-cast per grid step.
    w_qkv_bf16 = w_qkv.astype(jnp.bfloat16)                   # [3C, C]
    w_t_bf16 = jnp.transpose(w_proj).astype(jnp.bfloat16)     # [C_in, C_out]

    # 1x1-conv qkv (no bias) as a tiled matmul; q rows pre-scaled by hd**-0.5;
    # channel-major output so the attention is lane-dense on H*W.
    qkv_t = qkv_matmul_t(x.reshape(B * HW, C), w_qkv_bf16,
                         B=B, HW=HW, scale=scale, out_dtype=inter_dtype)  # [B,3C,HW]

    # All dilation groups / heads in one fused attention call -> [B, C, HW].
    y = dilate_attention_fused(qkv_t, dilation=dilation, kernel_size=kernel_size,
                               H=H, W=W, num_heads=num_heads, nh=nh, hd=hd)

    # proj Linear (with bias).
    out = proj_matmul(y, w_t_bf16, b_proj, out_dtype=x.dtype)             # [B,HW,C]
    return out.reshape(B, H, W, C)


# ---------------------------------------------------------------------------
# Pure-JAX reference (mirrors the PyTorch math) for a correctness check
# ---------------------------------------------------------------------------
def reference_forward(x, w_qkv, w_proj, b_proj, *, num_heads, kernel_size, dilation):
    B, H, W, C = x.shape
    nd = len(dilation)
    hd = C // num_heads
    nh = num_heads // nd
    scale = hd ** (-0.5)
    hp = jax.lax.Precision.HIGHEST

    qkv = jnp.dot(x.reshape(-1, C), w_qkv.T, precision=hp)
    qkv = qkv.reshape(B, H, W, 3, nd, nh, hd)
    qkv = jnp.transpose(qkv, (3, 4, 0, 5, 1, 2, 6))

    outs = []
    for i, dil in enumerate(dilation):
        q, k, v = qkv[0, i], qkv[1, i], qkv[2, i]
        pad = dil * (kernel_size - 1) // 2
        pads = ((0, 0), (0, 0), (pad, pad), (pad, pad), (0, 0))
        kp = jnp.pad(k, pads)
        vp = jnp.pad(v, pads)
        logits, vals = [], []
        for ky in range(kernel_size):
            for kx in range(kernel_size):
                ksl = kp[:, :, ky * dil:ky * dil + H, kx * dil:kx * dil + W, :]
                vsl = vp[:, :, ky * dil:ky * dil + H, kx * dil:kx * dil + W, :]
                logits.append(jnp.sum(q * ksl, axis=-1) * scale)
                vals.append(vsl)
        logits = jnp.stack(logits, axis=-1)                          # [B, nh, H, W, 9]
        p = jax.nn.softmax(logits, axis=-1)
        vals = jnp.stack(vals, axis=-2)                              # [B, nh, H, W, 9, hd]
        outs.append(jnp.sum(p[..., None] * vals, axis=-2))           # [B, nh, H, W, hd]

    y = jnp.stack(outs, axis=0)
    y = jnp.transpose(y, (1, 3, 4, 0, 2, 5)).reshape(B, H, W, C)
    out = jnp.dot(y.reshape(-1, C), w_proj.T, precision=hp) + b_proj
    return out.reshape(B, H, W, C)


if __name__ == "__main__":
    # Small, module-consistent shapes
    B, H, W = 2, 8, 8
    dim = 32
    num_heads = 4
    kernel_size = 3
    dilation = (2, 3)

    key = jax.random.PRNGKey(0)
    kx, kw1, kw2, kb = jax.random.split(key, 4)
    x = jax.random.normal(kx, (B, H, W, dim), jnp.float32)
    # Conv2d(dim, 3*dim, 1, bias=False) weight -> [3C, C]; Linear(dim, dim) -> [C, C], [C]
    w_qkv = jax.random.normal(kw1, (3 * dim, dim), jnp.float32) * (dim ** -0.5)
    w_proj = jax.random.normal(kw2, (dim, dim), jnp.float32) * (dim ** -0.5)
    b_proj = jax.random.normal(kb, (dim,), jnp.float32) * 0.02

    out = multi_dilate_local_attention(
        x, w_qkv, w_proj, b_proj,
        num_heads=num_heads, kernel_size=kernel_size, dilation=dilation,
    )
    out = jax.block_until_ready(out)

    ref = reference_forward(
        x, w_qkv, w_proj, b_proj,
        num_heads=num_heads, kernel_size=kernel_size, dilation=dilation,
    )
    ref = jax.block_until_ready(ref)

    np.testing.assert_allclose(np.asarray(out), np.asarray(ref), rtol=3e-2, atol=3e-2)
    assert out.shape == (B, H, W, dim)
    print("KERNEL_OK")
</pallas_src>

<mosaic_0001>
module attributes {stable_mosaic.version = 11 : i64} {
  func.func @_qkv_kernel(%arg0: i32, %arg1: i32, %arg2: memref<64x32xf32, #tpu.memory_space<vmem>>, %arg3: memref<96x32xbf16, #tpu.memory_space<vmem>>, %arg4: memref<1x96x64xf32, #tpu.memory_space<vmem>>) attributes {dimension_semantics = [#tpu.dimension_semantics<parallel>, #tpu.dimension_semantics<parallel>], iteration_bounds = array<i64: 2, 1>, scalar_prefetch = 0 : i64, scratch_operands = 0 : i64, tpu.core_type = #tpu.core_type<tc>, window_params = [{transform_indices = @transform_0, window_bounds = array<i64: 64, 32>}, {pipeline_mode = #tpu.pipeline_mode<synchronous>, transform_indices = @transform_1, window_bounds = array<i64: 96, 32>}, {transform_indices = @transform_2, window_bounds = array<i64: 1, 96, 64>}]} {
    %c0 = arith.constant 0 : index
    %c0_0 = arith.constant 0 : index
    %0 = vector.load %arg2[%c0, %c0_0] : memref<64x32xf32, #tpu.memory_space<vmem>>, vector<64x32xf32>
    %1 = arith.truncf %0 : vector<64x32xf32> to vector<64x32xbf16>
    %c0_1 = arith.constant 0 : index
    %c0_2 = arith.constant 0 : index
    %2 = vector.load %arg3[%c0_1, %c0_2] : memref<96x32xbf16, #tpu.memory_space<vmem>>, vector<96x32xbf16>
    %cst = arith.constant dense<0.000000e+00> : vector<96x64xf32>
    %3 = tpu.matmul %2, %1, %cst {dimension_numbers = #tpu.dot_dimension_numbers<[1], [1], [0], [0], [0, 0, 1, 0], [], []>} : vector<96x32xbf16>, vector<64x32xbf16>, vector<96x64xf32> -> vector<96x64xf32>
    %4 = tpu.iota {dimensions = array<i32: 0>} : vector<96x1xi32>
    %c32_i32 = arith.constant 32 : i32
    %5 = vector.broadcast %c32_i32 : i32 to vector<96x1xi32>
    %6 = arith.cmpi slt, %4, %5 : vector<96x1xi32>
    %cst_3 = arith.constant 0.353553385 : f32
    %cst_4 = arith.constant 1.000000e+00 : f32
    %7 = vector.broadcast %cst_3 : f32 to vector<96x1xf32>
    %8 = vector.broadcast %cst_4 : f32 to vector<96x1xf32>
    %9 = arith.select %6, %7, %8 : vector<96x1xi1>, vector<96x1xf32>
    %10 = vector.broadcast %9 : vector<96x1xf32> to vector<96x64xf32>
    %11 = arith.mulf %3, %10 : vector<96x64xf32>
    %c0_5 = arith.constant 0 : index
    %c0_6 = arith.constant 0 : index
    %c0_7 = arith.constant 0 : index
    %12 = vector.load %arg4[%c0_5, %c0_6, %c0_7] : memref<1x96x64xf32, #tpu.memory_space<vmem>>, vector<1x96x64xf32>
    %13 = vector.shape_cast %12 : vector<1x96x64xf32> to vector<96x64xf32>
    %14 = vector.shape_cast %11 : vector<96x64xf32> to vector<1x96x64xf32>
    tpu.vector_store %arg4[%c0_5, %c0_6, %c0_7], %14 {strides = array<i32>} : memref<1x96x64xf32, #tpu.memory_space<vmem>>, vector<1x96x64xf32>,
    return
  }
  func.func @transform_0(%arg0: i32, %arg1: i32) -> (i32, i32) {
    %c1_i32 = arith.constant 1 : i32
    %0 = arith.muli %arg0, %c1_i32 : i32
    %1 = arith.addi %0, %arg1 : i32
    %c0_i32 = arith.constant 0 : i32
    %c0_i32_0 = arith.constant 0 : i32
    return %1, %c0_i32 : i32, i32
  }
  func.func @transform_1(%arg0: i32, %arg1: i32) -> (i32, i32) {
    %c0_i32 = arith.constant 0 : i32
    %c0_i32_0 = arith.constant 0 : i32
    %c0_i32_1 = arith.constant 0 : i32
    return %c0_i32, %c0_i32_0 : i32, i32
  }
  func.func @transform_2(%arg0: i32, %arg1: i32) -> (i32, i32, i32) {
    %c0_i32 = arith.constant 0 : i32
    %c0_i32_0 = arith.constant 0 : i32
    return %arg0, %c0_i32, %arg1 : i32, i32, i32
  }
}

</mosaic_0001>

<llo_original>
// kernel: tpu_custom_call.1
$region0: #{tpu_custom_call.1}
  #allocation0 [shape = 'u32[]', space=smem, size = 0x4, offset = 0x4, fixed_abs, tag = 'smem constant byte address 0x4 - core index']
  #allocation1 [shape = 'u32[144,128]{1,0:T(1,128)}', space=vmem, size = 0x12000, scoped, tag = 'internal scratch']
  %s0 = inlined_call_operand.vmem [shape: f32[128,32], index: 0, kind: input, shape index: {}]
  %s1 = inlined_call_operand.vmem [shape: bf16[96,32], index: 1, kind: input, shape index: {}]
  %s2 = inlined_call_operand.vmem [shape: f32[2,96,64], index: 2, kind: output, shape index: {}]
  %s3 = sld [smem:[#allocation0]]
  $region41: #{tpu_custom_call.1} parent=0
    _
  %s5 = ssub.s32 1, %s3
  %s6 = scalar_select 0, %s5, %s3
  loop: start=0, step=1, limit=4
  $region2: #{tpu_custom_call.1} parent=0 // loop_pre_header
    _
  $region3: #{tpu_custom_call.1} parent=0 // loop_header
    %s8 = sphi 0, %s12
    %p9 = scmp.ge.s32.totalorder %s8, 4
    %s15 = sphi 0, %s27
    %s16 = sphi 0, %s23
    %s17 = sphi 0, %s15
    %s18 = sphi 0, %s16
    %s19 = sphi 0, %s17
    %s20 = sphi 0, %s18
    %s32 = sphi 0, %s34
    %s35 = sphi 0, %s32
    %s36 = sphi 0, %s35
    %s52 = sphi 0, %s36
    %s56 = sphi 0, %s56
    %s58 = sphi 0, %s56
    %s59 = sphi 0, %s58
    %s73 = sphi 0, %s59
    %s81 = sphi 0, %s83
    %s84 = sphi 0, %s81
    %s85 = sphi 0, %s84
    %s101 = sphi 0, %s85
  $region4: #{tpu_custom_call.1} parent=0 // loop_header_branch
    %11 = sbr.rel (%p9) target = $region8
  $region5: #{tpu_custom_call.1} parent=0 // loop_body
    %s13 = ssub.s32 %s8, 1
    %s14 = ssub.s32 %s8, 2
    %s21 = sadd.s32 1, %s16
    %p22 = scmp.ge.s32.totalorder %s21, 1
    %s23 = scalar_select %p22, 0, %s21
    %s24 = sadd.s32 1, %s15
    %s25 = scalar_select %p22, %s24, %s15
    %p26 = scmp.ge.s32.totalorder %s25, 2
    %s27 = scalar_select %p26, 0, %s25
    %s28 = sadd.s32 %s15, %s16
    %s29 = sadd.s32 %s27, %s23
    %s30 = ssub.s32 %s28, %s29
    %p31 = scmp.eq.s32.totalorder %s30, 0
    %s33 = sadd.s32 %s32, 1
    %s34 = scalar_select %p31, %s32, %s33
    %p37 = pneg %p31
    %p38 = scmp.eq.s32.totalorder %s8, 1
    %p39 = por %p37, %p38
    %p40 = scmp.ne.s32.totalorder %s32, %s35
    %p41 = scmp.eq.s32.totalorder %s8, 0
    %p42 = por %p40, %p41
    %p43 = scmp.ne.s32.totalorder %s32, %s35
    %p44 = scmp.eq.s32.totalorder %s13, 1
    %p45 = por %p43, %p44
    %p46 = scmp.ne.s32.totalorder %s35, %s36
    %p47 = scmp.eq.s32.totalorder %s13, 0
    %p48 = por %p46, %p47
    %p49 = scmp.ne.s32.totalorder %s35, %s36
    %p50 = scmp.eq.s32.totalorder %s14, 1
    %p51 = por %p49, %p50
    %p53 = scmp.ne.s32.totalorder %s36, %s52
    %p54 = scmp.eq.s32.totalorder %s14, 0
    %p55 = por %p53, %p54
    %s57 = sadd.s32 %s56, 1
    %p60 = scmp.eq.s32.totalorder %s8, 1
    %p61 = scmp.ne.s32.totalorder %s56, %s58
    %p62 = scmp.eq.s32.totalorder %s8, 0
    %p63 = por %p61, %p62
    %p64 = scmp.ne.s32.totalorder %s56, %s58
    %p65 = scmp.eq.s32.totalorder %s13, 1
    %p66 = por %p64, %p65
    %p67 = scmp.ne.s32.totalorder %s58, %s59
    %p68 = scmp.eq.s32.totalorder %s13, 0
    %p69 = por %p67, %p68
    %p70 = scmp.ne.s32.totalorder %s58, %s59
    %p71 = scmp.eq.s32.totalorder %s14, 1
    %p72 = por %p70, %p71
    %p74 = scmp.ne.s32.totalorder %s59, %s73
    %p75 = scmp.eq.s32.totalorder %s14, 0
    %p76 = por %p74, %p75
    %s77 = ssub.s32 %s15, %s27
    %s78 = ssub.s32 %s16, %s23
    %s79 = sor.u32 %s77, %s78
    %p80 = scmp.eq.s32.totalorder %s79, 0
    %s82 = sadd.s32 %s81, 1
    %s83 = scalar_select %p80, %s81, %s82
    %p86 = pneg %p80
    %p87 = scmp.eq.s32.totalorder %s8, 1
    %p88 = por %p86, %p87
    %p89 = scmp.ne.s32.totalorder %s81, %s84
    %p90 = scmp.eq.s32.totalorder %s8, 0
    %p91 = por %p89, %p90
    %p92 = scmp.ne.s32.totalorder %s81, %s84
    %p93 = scmp.eq.s32.totalorder %s13, 1
    %p94 = por %p92, %p93
    %p95 = scmp.ne.s32.totalorder %s84, %s85
    %p96 = scmp.eq.s32.totalorder %s13, 0
    %p97 = por %p95, %p96
    %p98 = scmp.ne.s32.totalorder %s84, %s85
    %p99 = scmp.eq.s32.totalorder %s14, 1
    %p100 = por %p98, %p99
    %p102 = scmp.ne.s32.totalorder %s85, %s101
    %p103 = scmp.eq.s32.totalorder %s14, 0
    %p104 = por %p102, %p103
    %p105 = scmp.le.s32.totalorder 1, %s8
    %p106 = scmp.lt.s32.totalorder %s8, 3
    %p107 = pnand %p105, %p106
    %p108 = pneg %p107
    // Predicated region
    $region9: #{tpu_custom_call.1} parent=5 // pred_check
      _
    $region10: #{tpu_custom_call.1} parent=5 // pred_check_branch
      %110 = sbr.rel (%p107) target = $region12
    $region11: #{tpu_custom_call.1} parent=5 // pred_region
      %s111 = ssub.s32 %s8, 1
      // Predicated region
      $region13: #{tpu_custom_call.1} parent=11 // pred_check
        %p112 = pneg %p69
      $region14: #{tpu_custom_call.1} parent=11 // pred_check_branch
        %114 = sbr.rel (%p112) target = $region16
      $region15: #{tpu_custom_call.1} parent=11 // pred_region
        _
      $region16: #{tpu_custom_call.1} parent=11 // pred_fallthru
        _
    $region12: #{tpu_custom_call.1} parent=5 // pred_fallthru
      _
    %p115 = scmp.lt.s32.totalorder %s8, 2
    // Predicated region
    $region17: #{tpu_custom_call.1} parent=5 // pred_check
      %p116 = pneg %p115
    $region18: #{tpu_custom_call.1} parent=5 // pred_check_branch
      %118 = sbr.rel (%p116) target = $region20
    $region19: #{tpu_custom_call.1} parent=5 // pred_region
      // Predicated region
      $region21: #{tpu_custom_call.1} parent=19 // pred_check
        %p119 = pneg %p42
      $region22: #{tpu_custom_call.1} parent=19 // pred_check_branch
        %121 = sbr.rel (%p119) target = $region24
      $region23: #{tpu_custom_call.1} parent=19 // pred_region
        %s122 = sadd.s32 %s15, %s16
        %s123 = smul.u32 8, %s122
        %p124 = scmp.lt.s32.totalorder %s123, 15
        %s125 = scalar_select %p124, %s123, 15
        %s126 = smul.addr %s125, 8
        %s127 = scalar_lea.vmem %s0, %s126
        %s128 = sadd.s32 %s15, %s16
        %s129 = smul.u32 8, %s128
      $region24: #{tpu_custom_call.1} parent=19 // pred_fallthru
        _
    $region20: #{tpu_custom_call.1} parent=5 // pred_fallthru
      _
    %p130 = scmp.le.s32.totalorder 1, %s8
    %p131 = scmp.lt.s32.totalorder %s8, 3
    %p132 = pnand %p130, %p131
    %p133 = pneg %p132
    // Predicated region
    $region25: #{tpu_custom_call.1} parent=5 // pred_check
      _
    $region26: #{tpu_custom_call.1} parent=5 // pred_check_branch
      %135 = sbr.rel (%p132) target = $region28
    $region27: #{tpu_custom_call.1} parent=5 // pred_region
      %s136 = ssub.s32 %s8, 1
      %s137 = sadd.s32 %s17, %s18
      %s138 = smul.u32 8, %s137
      %p139 = scmp.lt.s32.totalorder %s138, 15
      %s140 = scalar_select %p139, %s138, 15
      %s141 = smul.addr %s140, 8
      %s142 = scalar_lea.vmem %s0, %s141
      %p143 = pneg %p48
      %p144 = pneg %p45
      %p145 = pneg %p69
      %p146 = pneg %p66
      %p147 = pneg %p97
      %p148 = pneg %p94
      %p149 = scmp.lt.s32.totalorder %s17, 1
      %s150 = scalar_select %p149, %s17, 1
      %p151 = scmp.lt.s32.totalorder %s18, 0
      %s152 = scalar_select %p151, %s18, 0
      %s153 = smul.addr %s150, 12
      %s154 = sadd.s32 %s152, %s153
      %s155 = smul.addr %s154, 8
      %s156 = scalar_lea.vmem %s2, %s155
      %s157 = sadd.s32 %s17, %s18
      %s158 = smul.u32 8, %s157
      %p159 = scmp.lt.s32.totalorder %s158, 15
      %s160 = scalar_select %p159, %s158, 15
      %s161 = smul.addr %s160, 8
      %s162 = scalar_lea.vmem %s0, %s161
      %s163 = sadd.s32 %s17, %s18
      %s164 = smul.u32 8, %s163
      %p165 = scmp.lt.s32.totalorder %s17, 1
      %s166 = scalar_select %p165, %s17, 1
      %p167 = scmp.lt.s32.totalorder %s18, 0
      %s168 = scalar_select %p167, %s18, 0
      %s169 = smul.addr %s166, 12
      %s170 = sadd.s32 %s168, %s169
      %s171 = smul.addr %s170, 8
      %s172 = scalar_lea.vmem %s2, %s171
      %v174 = vld [vmem:[%s162] sm:$0xff]
      %v175 = vld [vmem:[%s162 + $0x8] sm:$0xff]
      %v176 = vld [vmem:[%s162 + $0x10] sm:$0xff]
      %v177 = vld [vmem:[%s162 + $0x18] sm:$0xff]
      %v178 = vld [vmem:[%s162 + $0x20] sm:$0xff]
      %v179 = vld [vmem:[%s162 + $0x28] sm:$0xff]
      %v180 = vld [vmem:[%s162 + $0x30] sm:$0xff]
      %v181 = vld [vmem:[%s162 + $0x38] sm:$0xff]
      %v182 = vpack.c.bf16 %v175, %v174
      %v183 = vpack.c.bf16 %v177, %v176
      %v184 = vpack.c.bf16 %v179, %v178
      %v185 = vpack.c.bf16 %v181, %v180
      %v186 = vld [vmem:[%s1] sm:$0xf]
      %v187 = vld [vmem:[%s1 + $0x4] sm:$0xf]
      %v188 = vld [vmem:[%s1 + $0x8] sm:$0xf]
      %v189 = vld [vmem:[%s1 + $0xc] sm:$0xf]
      %v190 = vld [vmem:[%s1 + $0x10] sm:$0xf]
      %v191 = vld [vmem:[%s1 + $0x14] sm:$0xf]
      %v192 = vld [vmem:[%s1 + $0x18] sm:$0xf]
      %v193 = vld [vmem:[%s1 + $0x1c] sm:$0xf]
      %v194 = vld [vmem:[%s1 + $0x20] sm:$0xf]
      %v195 = vld [vmem:[%s1 + $0x24] sm:$0xf]
      %v196 = vld [vmem:[%s1 + $0x28] sm:$0xf]
      %v197 = vld [vmem:[%s1 + $0x2c] sm:$0xf]
      %v210 = vunpack.c.l.b16 %v186
      %v211 = vunpack.c.l.b16 %v187
      %v212 = vunpack.c.l.b16 %v188
      %v213 = vunpack.c.l.b16 %v189
      %v214 = vunpack.c.l.b16 %v190
      %v215 = vunpack.c.l.b16 %v191
      %v216 = vunpack.c.l.b16 %v192
      %v217 = vunpack.c.l.b16 %v193
      %v218 = vunpack.c.l.b16 %v194
      %v219 = vunpack.c.l.b16 %v195
      %v220 = vunpack.c.l.b16 %v196
      %v221 = vunpack.c.l.b16 %v197
      %v222 = vpack.c.b16 %v211, %v210
      %v223 = vpack.c.b16 %v213, %v212
      %v224 = vpack.c.b16 %v215, %v214
      %v225 = vpack.c.b16 %v217, %v216
      %v226 = vpack.c.b16 %v219, %v218
      %v227 = vpack.c.b16 %v221, %v220
      %vm228 = vcmask 261120
      %v230 = vsel %vm228, %v222, 0
      %v233 = vsel %vm228, %v223, 0
      %v236 = vsel %vm228, %v224, 0
      %v239 = vsel %vm228, %v225, 0
      %v242 = vsel %vm228, %v226, 0
      %v245 = vsel %vm228, %v227, 0
      %v248 = vsel %vm228, %v182, 0
      %v251 = vsel %vm228, %v183, 0
      %v254 = vsel %vm228, %v184, 0
      %v257 = vsel %vm228, %v185, 0
      %259 = vmatprep.subr.bf16.mxu0 0
      %260 = vmatpush1.bf16.xpose.msra.mxu0 %v248
      %261 = vmatprep.subr.bf16.mxu0 0
      %262 = vmatpush1.bf16.xpose.msra.mxu0 %v251
      %263 = vmatprep.subr.bf16.mxu0 0
      %264 = vmatpush1.bf16.xpose.msra.mxu0 %v254
      %265 = vmatprep.subr.bf16.mxu0 0
      %266 = vmatpush1.bf16.xpose.msra.mxu0 %v257
      %267 = vmatprep.subr.bf16.mxu0 0
      %268 = vmatpush1.bf16.xpose.msra.mxu0 0
      %269 = vmatprep.subr.bf16.mxu0 0
      %270 = vmatpush1.bf16.xpose.msra.mxu0 0
      %271 = vmatprep.subr.bf16.mxu0 0
      %272 = vmatpush1.bf16.xpose.msra.mxu0 0
      %273 = vmatprep.subr.bf16.mxu0 0
      %274 = vmatpush1.bf16.xpose.msra.mxu0 0
      %275 = vmatprep.subr.bf16.mxu0 0
      %276 = vmatpush1.bf16.xpose.msra.mxu0 0
      %277 = vmatprep.subr.bf16.mxu0 0
      %278 = vmatpush1.bf16.xpose.msra.mxu0 0
      %279 = vmatprep.subr.bf16.mxu0 0
      %280 = vmatpush1.bf16.xpose.msra.mxu0 0
      %281 = vmatprep.subr.bf16.mxu0 0
      %282 = vmatpush1.bf16.xpose.msra.mxu0 0
      %283 = vmatprep.subr.bf16.mxu0 0
      %284 = vmatpush1.bf16.xpose.msra.mxu0 0
      %285 = vmatprep.subr.bf16.mxu0 0
      %286 = vmatpush1.bf16.xpose.msra.mxu0 0
      %287 = vmatprep.subr.bf16.mxu0 0
      %288 = vmatpush1.bf16.xpose.msra.mxu0 0
      %289 = vmatprep.subr.bf16.mxu0 0
      %290 = vmatpush1.bf16.xpose.msra.mxu0 0
      %291 = vmatprep.mubr.bf16.mxu0 0
      %292 = vmatmul.mubr.bf16.gmra.mrb[0].mxu0 %v230
      %v293 = vpop.f32.mrb[0].mxu0
      %v294 = vadd.f32 0.0, %v293
      %v295 = vpop.f32.mrb[0].mxu0
      %v296 = vpop.f32.mrb[0].mxu0
      %v297 = vadd.f32 0.0, %v296
      %v298 = vpop.f32.mrb[0].mxu0
      %299 = vmatprep.mubr.bf16.mxu0 0
      %300 = vmatmul.mubr.bf16.gmra.mrb[0].mxu0 %v233
      %v301 = vpop.f32.mrb[0].mxu0
      %v302 = vadd.f32 0.0, %v301
      %v303 = vpop.f32.mrb[0].mxu0
      %v304 = vpop.f32.mrb[0].mxu0
      %v305 = vadd.f32 0.0, %v304
      %v306 = vpop.f32.mrb[0].mxu0
      %307 = vmatprep.mubr.bf16.mxu0 0
      %308 = vmatmul.mubr.bf16.gmra.mrb[0].mxu0 %v236
      %v309 = vpop.f32.mrb[0].mxu0
      %v310 = vadd.f32 0.0, %v309
      %v311 = vpop.f32.mrb[0].mxu0
      %v312 = vpop.f32.mrb[0].mxu0
      %v313 = vadd.f32 0.0, %v312
      %v314 = vpop.f32.mrb[0].mxu0
      %315 = vmatprep.mubr.bf16.mxu0 0
      %316 = vmatmul.mubr.bf16.gmra.mrb[0].mxu0 %v239
      %v317 = vpop.f32.mrb[0].mxu0
      %v318 = vadd.f32 0.0, %v317
      %v319 = vpop.f32.mrb[0].mxu0
      %v320 = vpop.f32.mrb[0].mxu0
      %v321 = vadd.f32 0.0, %v320
      %v322 = vpop.f32.mrb[0].mxu0
      %323 = vmatprep.mubr.bf16.mxu0 0
      %324 = vmatmul.mubr.bf16.gmra.mrb[0].mxu0 %v242
      %v325 = vpop.f32.mrb[0].mxu0
      %v326 = vadd.f32 0.0, %v325
      %v327 = vpop.f32.mrb[0].mxu0
      %v328 = vpop.f32.mrb[0].mxu0
      %v329 = vadd.f32 0.0, %v328
      %v330 = vpop.f32.mrb[0].mxu0
      %331 = vmatprep.mubr.bf16.mxu0 0
      %332 = vmatmul.mubr.bf16.gmra.mrb[0].mxu0 %v245
      %v333 = vpop.f32.mrb[0].mxu0
      %v334 = vadd.f32 0.0, %v333
      %v335 = vpop.f32.mrb[0].mxu0
      %v336 = vpop.f32.mrb[0].mxu0
      %v337 = vadd.f32 0.0, %v336
      %v338 = vpop.f32.mrb[0].mxu0
      %339 = vdwg.mxu0
      %v340 = vlaneseq
      %v341 = vshrl.u32 %v340, 7
      %v342 = vadd.s32 %v341, 8
      %v343 = vadd.s32 %v341, 16
      %v344 = vadd.s32 %v341, 24
      %v345 = vadd.s32 %v341, 32
      %v346 = vadd.s32 %v341, 40
      %v347 = vadd.s32 %v341, 48
      %v348 = vadd.s32 %v341, 56
      %v349 = vadd.s32 %v341, 64
      %v350 = vadd.s32 %v341, 72
      %v351 = vadd.s32 %v341, 80
      %v352 = vadd.s32 %v341, 88
      %vm353 = vcmp.lt.s32.totalorder %v341, 32
      %vm354 = vcmp.lt.s32.totalorder %v342, 32
      %vm355 = vcmp.lt.s32.totalorder %v343, 32
      %vm356 = vcmp.lt.s32.totalorder %v344, 32
      %vm357 = vcmp.lt.s32.totalorder %v345, 32
      %vm358 = vcmp.lt.s32.totalorder %v346, 32
      %vm359 = vcmp.lt.s32.totalorder %v347, 32
      %vm360 = vcmp.lt.s32.totalorder %v348, 32
      %vm361 = vcmp.lt.s32.totalorder %v349, 32
      %vm362 = vcmp.lt.s32.totalorder %v350, 32
      %vm363 = vcmp.lt.s32.totalorder %v351, 32
      %vm364 = vcmp.lt.s32.totalorder %v352, 32
      %v365 = vsel %vm353, 0.35355338, 1.0
      %v366 = vsel %vm354, 0.35355338, 1.0
      %v367 = vsel %vm355, 0.35355338, 1.0
      %v368 = vsel %vm356, 0.35355338, 1.0
      %v369 = vsel %vm357, 0.35355338, 1.0
      %v370 = vsel %vm358, 0.35355338, 1.0
      %v371 = vsel %vm359, 0.35355338, 1.0
      %v372 = vsel %vm360, 0.35355338, 1.0
      %v373 = vsel %vm361, 0.35355338, 1.0
      %v374 = vsel %vm362, 0.35355338, 1.0
      %v375 = vsel %vm363, 0.35355338, 1.0
      %v376 = vsel %vm364, 0.35355338, 1.0
      %v377 = vmul.f32 %v294, %v365
      %v378 = vmul.f32 %v297, %v366
      %v379 = vmul.f32 %v302, %v367
      %v380 = vmul.f32 %v305, %v368
      %v381 = vmul.f32 %v310, %v369
      %v382 = vmul.f32 %v313, %v370
      %v383 = vmul.f32 %v318, %v371
      %v384 = vmul.f32 %v321, %v372
      %v385 = vmul.f32 %v326, %v373
      %v386 = vmul.f32 %v329, %v374
      %v387 = vmul.f32 %v334, %v375
      %v388 = vmul.f32 %v337, %v376
      %vm389 = vcmask 523264
      %390 = vst.msk [vmem:[%s172] sm:$0xff] %vm389, %v377
      %391 = vst.msk [vmem:[%s172 + $0x8] sm:$0xff] %vm389, %v378
      %392 = vst.msk [vmem:[%s172 + $0x10] sm:$0xff] %vm389, %v379
      %393 = vst.msk [vmem:[%s172 + $0x18] sm:$0xff] %vm389, %v380
      %394 = vst.msk [vmem:[%s172 + $0x20] sm:$0xff] %vm389, %v381
      %395 = vst.msk [vmem:[%s172 + $0x28] sm:$0xff] %vm389, %v382
      %396 = vst.msk [vmem:[%s172 + $0x30] sm:$0xff] %vm389, %v383
      %397 = vst.msk [vmem:[%s172 + $0x38] sm:$0xff] %vm389, %v384
      %398 = vst.msk [vmem:[%s172 + $0x40] sm:$0xff] %vm389, %v385
      %399 = vst.msk [vmem:[%s172 + $0x48] sm:$0xff] %vm389, %v386
      %400 = vst.msk [vmem:[%s172 + $0x50] sm:$0xff] %vm389, %v387
      %401 = vst.msk [vmem:[%s172 + $0x58] sm:$0xff] %vm389, %v388
      %p402 = scmp.lt.s32.totalorder %s17, 1
      %s403 = scalar_select %p402, %s17, 1
      %p404 = scmp.lt.s32.totalorder %s18, 0
      %s405 = scalar_select %p404, %s18, 0
      %s406 = smul.addr %s403, 12
      %s407 = sadd.s32 %s405, %s406
      %s408 = smul.addr %s407, 8
      %s409 = scalar_lea.vmem %s2, %s408
      // Predicated region
      $region29: #{tpu_custom_call.1} parent=27 // pred_check
        %p410 = pneg %p94
      $region30: #{tpu_custom_call.1} parent=27 // pred_check_branch
        %412 = sbr.rel (%p410) target = $region32
      $region31: #{tpu_custom_call.1} parent=27 // pred_region
        _
      $region32: #{tpu_custom_call.1} parent=27 // pred_fallthru
        _
    $region28: #{tpu_custom_call.1} parent=5 // pred_fallthru
      _
    %p413 = scmp.le.s32.totalorder 2, %s8
    // Predicated region
    $region33: #{tpu_custom_call.1} parent=5 // pred_check
      %p414 = pneg %p413
    $region34: #{tpu_custom_call.1} parent=5 // pred_check_branch
      %416 = sbr.rel (%p414) target = $region36
    $region35: #{tpu_custom_call.1} parent=5 // pred_region
      %s417 = ssub.s32 %s8, 2
      // Predicated region
      $region37: #{tpu_custom_call.1} parent=35 // pred_check
        %p418 = pneg %p100
      $region38: #{tpu_custom_call.1} parent=35 // pred_check_branch
        %420 = sbr.rel (%p418) target = $region40
      $region39: #{tpu_custom_call.1} parent=35 // pred_region
        %p421 = scmp.lt.s32.totalorder %s19, 1
        %s422 = scalar_select %p421, %s19, 1
        %p423 = scmp.lt.s32.totalorder %s20, 0
        %s424 = scalar_select %p423, %s20, 0
        %s425 = smul.addr %s422, 12
        %s426 = sadd.s32 %s424, %s425
        %s427 = smul.addr %s426, 8
        %s428 = scalar_lea.vmem %s2, %s427
      $region40: #{tpu_custom_call.1} parent=35 // pred_fallthru
        _
    $region36: #{tpu_custom_call.1} parent=5 // pred_fallthru
      _
  $region6: #{tpu_custom_call.1} parent=0 // loop_footer
    %s12 = sadd.s32 1, %s8
  $region7: #{tpu_custom_call.1} parent=0 // loop_footer_branch
    %7 = sbr.rel target = $region3
  $region8: #{tpu_custom_call.1} parent=0 // loop_exit
    _

</llo_original>
